<compile_context>
chip_gen: v7x
topology: tpu7x:2x2x1
jax: 0.10.0
libtpu: 0.0.40
codegen_flags: <defaults>
</compile_context>

<pallas_src>
import functools

import jax
import jax.numpy as jnp
from jax import lax
from jax.experimental import pallas as pl
from jax.experimental.pallas import tpu as pltpu


# --------------------------------------------------------------------------
# One-shot K/V projection kernel (hoisted out of the per-q-tile grid).
# --------------------------------------------------------------------------
def _kv_project_kernel(k_ref, v_ref, wk_ref, wv_ref, kp_ref, vp_ref):
    f32 = jnp.float32
    kp_ref[...] = jnp.dot(k_ref[...], wk_ref[...],
                          preferred_element_type=f32).astype(kp_ref.dtype)
    vp_ref[...] = jnp.dot(v_ref[...], wv_ref[...],
                          preferred_element_type=f32).astype(vp_ref.dtype)


# --------------------------------------------------------------------------
# Main attention kernel (q-tiled grid).
# --------------------------------------------------------------------------
def _h_attention_kernel(q_ref, kp_ref, vp_ref, wq_ref, wfc_ref,
                        gamma_ref, beta_ref, *rest,
                        n_head, d_k, len_k, k_chunk, eps, compute_dtype,
                        approx_recip, return_attn):
    if return_attn:
        out_ref, attn_ref, ctx_ref = rest
    else:
        out_ref, ctx_ref = rest
        attn_ref = None

    f32 = jnp.float32
    cd = compute_dtype

    q = q_ref[...]                                   # (TQ, d_model)
    residual = q.astype(f32)

    # q projection; w_q is pre-scaled by 1/sqrt(d_k) and pre-cast in the wrapper.
    qp = jnp.dot(q.astype(cd), wq_ref[...], preferred_element_type=f32).astype(cd)

    dn = (((1,), (1,)), ((), ()))                    # contract d_k of both sides

    for h in range(n_head):                          # static unroll, n_head small
        lo = h * d_k
        qh = qp[:, lo:lo + d_k]                      # (TQ, d_k), compute dtype

        if return_attn:
            # Exact full-score softmax (probabilities are an output anyway).
            kh = kp_ref[:, pl.ds(lo, d_k)]
            vh = vp_ref[:, pl.ds(lo, d_k)]
            s = lax.dot_general(qh, kh, dn, preferred_element_type=f32)
            s = s - jnp.max(s, axis=-1, keepdims=True)
            e = jnp.exp(s)
            denom = jnp.sum(e, axis=-1, keepdims=True)
            attn = e * pl.reciprocal(denom, approx=True) if approx_recip \
                else e / denom
            attn_ref[h, :, :] = attn.astype(attn_ref.dtype)
            ctx = jnp.dot(attn.astype(cd), vh, preferred_element_type=f32)
        else:
            # Flash-style online softmax over k chunks: bounds live score
            # footprint to (TQ, k_chunk) instead of (TQ, len_k).
            tq = qh.shape[0]
            m = jnp.full((tq, 1), -jnp.inf, f32)
            l = jnp.zeros((tq, 1), f32)
            acc = jnp.zeros((tq, d_k), f32)
            n_chunks = -(-len_k // k_chunk)
            for c in range(n_chunks):
                klo = c * k_chunk
                cur = min(k_chunk, len_k - klo)
                kc = kp_ref[pl.ds(klo, cur), pl.ds(lo, d_k)]
                vc = vp_ref[pl.ds(klo, cur), pl.ds(lo, d_k)]
                s = lax.dot_general(qh, kc, dn, preferred_element_type=f32)
                m_new = jnp.maximum(m, jnp.max(s, axis=-1, keepdims=True))
                alpha = jnp.exp(m - m_new)
                p = jnp.exp(s - m_new)
                l = alpha * l + jnp.sum(p, axis=-1, keepdims=True)
                acc = alpha * acc + jnp.dot(p.astype(cd), vc,
                                            preferred_element_type=f32)
                m = m_new
            ctx = acc * pl.reciprocal(l, approx=True) if approx_recip \
                else acc / l

        # Per-head context assembled in VMEM scratch (compute dtype, no concat).
        ctx_ref[:, pl.ds(lo, d_k)] = ctx.astype(ctx_ref.dtype)

    # Output projection as one wide matmul, then residual + LayerNorm.
    o = jnp.dot(ctx_ref[...], wfc_ref[...], preferred_element_type=f32)
    # TODO(synk): attention dropout and output dropout are identity (eval mode).
    o = o + residual
    mean = jnp.mean(o, axis=-1, keepdims=True)
    var = jnp.mean(jnp.square(o - mean), axis=-1, keepdims=True)
    o = (o - mean) * lax.rsqrt(var + eps)
    o = o * gamma_ref[...].astype(f32) + beta_ref[...].astype(f32)
    out_ref[...] = o.astype(out_ref.dtype)


def _vmem_capacity_bytes():
    try:
        info = pltpu.get_tpu_info()
        cap = getattr(info, "vmem_capacity_bytes", None)
        if cap:
            return int(cap)
    except Exception:
        pass
    return 64 << 20                                  # conservative (v7x per-TC)


def h_attention(q, k, v, wq, wk, wv, wfc, gamma, beta, *, n_head,
                q_tile=512, k_chunk=512, compute_dtype=jnp.float32,
                attn_dtype=jnp.float32, approx_softmax_recip=False,
                return_attn=True):
    """Pallas H_Attention forward. Weights are (in_features, out_features)."""
    len_q, d_model = q.shape
    len_k = k.shape[0]
    assert k.shape == v.shape, "len_k must equal len_v for attention"
    assert d_model % n_head == 0
    d_k = d_model // n_head
    temperature = d_k ** 0.5
    cd = compute_dtype
    cd_size = jnp.dtype(cd).itemsize
    cap = _vmem_capacity_bytes()

    # Fold temperature into w_q; pre-cast constant operands to compute dtype.
    wq_cd = (wq / temperature).astype(cd)
    wk_cd = wk.astype(cd)
    wv_cd = wv.astype(cd)
    wfc_cd = wfc.astype(cd)
    k_cd = k.astype(cd)
    v_cd = v.astype(cd)
    gamma = gamma.reshape(1, d_model).astype(jnp.float32)
    beta = beta.reshape(1, d_model).astype(jnp.float32)

    vmem_resident = pl.BlockSpec(memory_space=pltpu.MemorySpace.VMEM)

    # ---- one-shot K/V projections (computed once, not per q tile) ----------
    tr = min(512, len_k)
    if tr != len_k:
        tr = max(8, (tr // 8) * 8)
    proj_est = (2 * d_model * d_model * cd_size
                + 8 * tr * d_model * cd_size + (8 << 20))
    proj_limit = int(min(max(proj_est, 32 << 20), int(cap * 0.9)))
    kp, vp = pl.pallas_call(
        _kv_project_kernel,
        grid=(pl.cdiv(len_k, tr),),
        in_specs=[pl.BlockSpec((tr, d_model), lambda i: (i, 0)),
                  pl.BlockSpec((tr, d_model), lambda i: (i, 0)),
                  vmem_resident, vmem_resident],
        out_specs=(pl.BlockSpec((tr, d_model), lambda i: (i, 0)),
                   pl.BlockSpec((tr, d_model), lambda i: (i, 0))),
        out_shape=(jax.ShapeDtypeStruct((len_k, d_model), cd),
                   jax.ShapeDtypeStruct((len_k, d_model), cd)),
        compiler_params=pltpu.CompilerParams(
            dimension_semantics=("parallel",),
            vmem_limit_bytes=proj_limit),
    )(k_cd, v_cd, wk_cd, wv_cd)

    # ---- q tiling (>=2 grid steps when possible so both v7x TCs get work) --
    tq = min(q_tile, len_q)
    if len_q >= 16:
        half = ((len_q + 1) // 2 + 7) // 8 * 8
        tq = min(tq, max(8, half))
    if tq != len_q:
        tq = max(8, (tq // 8) * 8)
    grid = (pl.cdiv(len_q, tq),)

    in_specs = [
        pl.BlockSpec((tq, d_model), lambda i: (i, 0)),   # q tile (pipelined)
        vmem_resident,                                   # kp (resident, cd)
        vmem_resident,                                   # vp (resident, cd)
        vmem_resident,                                   # w_q (pre-scaled, cd)
        vmem_resident,                                   # fc weight (cd)
        vmem_resident,                                   # gamma (f32)
        vmem_resident,                                   # beta  (f32)
    ]

    if return_attn:
        out_shape = (jax.ShapeDtypeStruct((len_q, d_model), q.dtype),
                     jax.ShapeDtypeStruct((n_head, len_q, len_k), attn_dtype))
        out_specs = (pl.BlockSpec((tq, d_model), lambda i: (i, 0)),
                     pl.BlockSpec((n_head, tq, len_k), lambda i: (0, i, 0)))
    else:
        out_shape = jax.ShapeDtypeStruct((len_q, d_model), q.dtype)
        out_specs = pl.BlockSpec((tq, d_model), lambda i: (i, 0))

    # VMEM budget: resident constants (single copy) + pipelined q/out(/attn)
    # tiles (double-buffered) + ctx scratch + headroom, per-generation cap.
    in_size = jnp.dtype(q.dtype).itemsize
    attn_size = jnp.dtype(attn_dtype).itemsize
    resident = ((2 * len_k * d_model + 2 * d_model * d_model) * cd_size
                + 2 * d_model * 4)
    per_tile = 2 * tq * d_model * in_size
    if return_attn:
        per_tile += n_head * tq * len_k * attn_size
    est = resident + 2 * per_tile + tq * d_model * cd_size + (8 << 20)
    vmem_limit = int(min(max(est, 32 << 20), int(cap * 0.9)))

    kernel = functools.partial(
        _h_attention_kernel, n_head=n_head, d_k=d_k, len_k=len_k,
        k_chunk=min(k_chunk, len_k), eps=1e-6, compute_dtype=cd,
        approx_recip=approx_softmax_recip, return_attn=return_attn)

    return pl.pallas_call(
        kernel,
        grid=grid,
        in_specs=in_specs,
        out_specs=out_specs,
        out_shape=out_shape,
        scratch_shapes=[pltpu.VMEM((tq, d_model), cd)],
        compiler_params=pltpu.CompilerParams(
            dimension_semantics=("parallel",),
            vmem_limit_bytes=vmem_limit),
    )(q, kp, vp, wq_cd, wfc_cd, gamma, beta)


def h_attention_ref(q, k, v, wq, wk, wv, wfc, gamma, beta, *, n_head):
    """Pure-JAX reference mirroring the PyTorch forward (mask=None, eval)."""
    len_q, d_model = q.shape
    d_k = d_model // n_head
    residual = q
    qp = (q @ wq).reshape(len_q, n_head, d_k).transpose(1, 0, 2)
    kp = (k @ wk).reshape(k.shape[0], n_head, d_k).transpose(1, 0, 2)
    vp = (v @ wv).reshape(v.shape[0], n_head, d_k).transpose(1, 0, 2)
    attn = jnp.einsum("hqd,hkd->hqk", qp / (d_k ** 0.5), kp)
    attn = jax.nn.softmax(attn, axis=-1)
    o = jnp.einsum("hqk,hkd->hqd", attn, vp)
    o = o.transpose(1, 0, 2).reshape(len_q, n_head * d_k)
    o = o @ wfc + residual
    mean = jnp.mean(o, axis=-1, keepdims=True)
    var = jnp.mean((o - mean) ** 2, axis=-1, keepdims=True)
    o = (o - mean) / jnp.sqrt(var + 1e-6)
    o = o * gamma.reshape(1, -1) + beta.reshape(1, -1)
    return o, attn


if __name__ == "__main__":
    n_head = 4
    d_model = 32
    seq = 8

    key = jax.random.PRNGKey(0)
    kq, kk, kv, kwq, kwk, kwv, kwf, kg, kb = jax.random.split(key, 9)

    q = jax.random.normal(kq, (seq, d_model), dtype=jnp.float32)
    k = jax.random.normal(kk, (seq, d_model), dtype=jnp.float32)
    v = jax.random.normal(kv, (seq, d_model), dtype=jnp.float32)

    # (in, out) layout, Linear has no bias.
    wq = 0.1 * jax.random.normal(kwq, (d_model, d_model), dtype=jnp.float32)
    wk = 0.1 * jax.random.normal(kwk, (d_model, d_model), dtype=jnp.float32)
    wv = 0.1 * jax.random.normal(kwv, (d_model, d_model), dtype=jnp.float32)
    wfc = 0.1 * jax.random.normal(kwf, (d_model, d_model), dtype=jnp.float32)
    gamma = 1.0 + 0.1 * jax.random.normal(kg, (1, d_model), dtype=jnp.float32)
    beta = 0.1 * jax.random.normal(kb, (1, d_model), dtype=jnp.float32)

    out_ref, attn_ref = h_attention_ref(q, k, v, wq, wk, wv, wfc, gamma, beta,
                                        n_head=n_head)

    # 1) Accuracy configuration: f32 operands, exact softmax, attn probs out.
    out, attn = h_attention(q, k, v, wq, wk, wv, wfc, gamma, beta,
                            n_head=n_head, compute_dtype=jnp.float32,
                            approx_softmax_recip=False, return_attn=True)
    out = jax.block_until_ready(out)
    attn = jax.block_until_ready(attn)
    assert out.shape == (seq, d_model) and attn.shape == (n_head, seq, seq)
    assert jnp.allclose(out, out_ref, atol=1e-4, rtol=1e-4)
    assert jnp.allclose(attn, attn_ref, atol=1e-5, rtol=1e-5)

    # 2) Performance configuration (v6e/v7x style): bf16 MXU operands with f32
    #    accumulation, approx-reciprocal online softmax, no attn output.
    out_fast = h_attention(q, k, v, wq, wk, wv, wfc, gamma, beta,
                           n_head=n_head, compute_dtype=jnp.bfloat16,
                           approx_softmax_recip=True, return_attn=False)
    out_fast = jax.block_until_ready(out_fast)
    assert out_fast.shape == (seq, d_model)
    assert bool(jnp.all(jnp.isfinite(out_fast)))
    assert jnp.allclose(out_fast, out_ref, atol=1e-1, rtol=1e-1)

    print("KERNEL_OK")
</pallas_src>

<mosaic_0001>
module attributes {stable_mosaic.version = 11 : i64} {
  func.func @_kv_project_kernel(%arg0: i32, %arg1: memref<8x32xf32, #tpu.memory_space<vmem>>, %arg2: memref<8x32xf32, #tpu.memory_space<vmem>>, %arg3: memref<32x32xf32, #tpu.memory_space<vmem>>, %arg4: memref<32x32xf32, #tpu.memory_space<vmem>>, %arg5: memref<8x32xf32, #tpu.memory_space<vmem>>, %arg6: memref<8x32xf32, #tpu.memory_space<vmem>>) attributes {dimension_semantics = [#tpu.dimension_semantics<parallel>], iteration_bounds = array<i64: 1>, scalar_prefetch = 0 : i64, scratch_operands = 0 : i64, tpu.core_type = #tpu.core_type<tc>, window_params = [{transform_indices = @transform_0, window_bounds = array<i64: 8, 32>}, {transform_indices = @transform_1, window_bounds = array<i64: 8, 32>}, {pipeline_mode = #tpu.pipeline_mode<synchronous>, transform_indices = @transform_2, window_bounds = array<i64: 32, 32>}, {pipeline_mode = #tpu.pipeline_mode<synchronous>, transform_indices = @transform_3, window_bounds = array<i64: 32, 32>}, {transform_indices = @transform_4, window_bounds = array<i64: 8, 32>}, {transform_indices = @transform_5, window_bounds = array<i64: 8, 32>}]} {
    %c0 = arith.constant 0 : index
    %c0_0 = arith.constant 0 : index
    %0 = vector.load %arg1[%c0, %c0_0] : memref<8x32xf32, #tpu.memory_space<vmem>>, vector<8x32xf32>
    %c0_1 = arith.constant 0 : index
    %c0_2 = arith.constant 0 : index
    %1 = vector.load %arg3[%c0_1, %c0_2] : memref<32x32xf32, #tpu.memory_space<vmem>>, vector<32x32xf32>
    %cst = arith.constant dense<0.000000e+00> : vector<8x32xf32>
    %2 = tpu.matmul %0, %1, %cst {dimension_numbers = #tpu.dot_dimension_numbers<[1], [0], [0], [1], [0, 0, 1, 1], [], []>} : vector<8x32xf32>, vector<32x32xf32>, vector<8x32xf32> -> vector<8x32xf32>
    %c0_3 = arith.constant 0 : index
    %c0_4 = arith.constant 0 : index
    %3 = vector.load %arg5[%c0_3, %c0_4] : memref<8x32xf32, #tpu.memory_space<vmem>>, vector<8x32xf32>
    tpu.vector_store %arg5[%c0_3, %c0_4], %2 {strides = array<i32>} : memref<8x32xf32, #tpu.memory_space<vmem>>, vector<8x32xf32>,
    %c0_5 = arith.constant 0 : index
    %c0_6 = arith.constant 0 : index
    %4 = vector.load %arg2[%c0_5, %c0_6] : memref<8x32xf32, #tpu.memory_space<vmem>>, vector<8x32xf32>
    %c0_7 = arith.constant 0 : index
    %c0_8 = arith.constant 0 : index
    %5 = vector.load %arg4[%c0_7, %c0_8] : memref<32x32xf32, #tpu.memory_space<vmem>>, vector<32x32xf32>
    %cst_9 = arith.constant dense<0.000000e+00> : vector<8x32xf32>
    %6 = tpu.matmul %4, %5, %cst_9 {dimension_numbers = #tpu.dot_dimension_numbers<[1], [0], [0], [1], [0, 0, 1, 1], [], []>} : vector<8x32xf32>, vector<32x32xf32>, vector<8x32xf32> -> vector<8x32xf32>
    %c0_10 = arith.constant 0 : index
    %c0_11 = arith.constant 0 : index
    %7 = vector.load %arg6[%c0_10, %c0_11] : memref<8x32xf32, #tpu.memory_space<vmem>>, vector<8x32xf32>
    tpu.vector_store %arg6[%c0_10, %c0_11], %6 {strides = array<i32>} : memref<8x32xf32, #tpu.memory_space<vmem>>, vector<8x32xf32>,
    return
  }
  func.func @transform_0(%arg0: i32) -> (i32, i32) {
    %c0_i32 = arith.constant 0 : i32
    %c0_i32_0 = arith.constant 0 : i32
    return %arg0, %c0_i32 : i32, i32
  }
  func.func @transform_1(%arg0: i32) -> (i32, i32) {
    %c0_i32 = arith.constant 0 : i32
    %c0_i32_0 = arith.constant 0 : i32
    return %arg0, %c0_i32 : i32, i32
  }
  func.func @transform_2(%arg0: i32) -> (i32, i32) {
    %c0_i32 = arith.constant 0 : i32
    %c0_i32_0 = arith.constant 0 : i32
    %c0_i32_1 = arith.constant 0 : i32
    return %c0_i32, %c0_i32_0 : i32, i32
  }
  func.func @transform_3(%arg0: i32) -> (i32, i32) {
    %c0_i32 = arith.constant 0 : i32
    %c0_i32_0 = arith.constant 0 : i32
    %c0_i32_1 = arith.constant 0 : i32
    return %c0_i32, %c0_i32_0 : i32, i32
  }
  func.func @transform_4(%arg0: i32) -> (i32, i32) {
    %c0_i32 = arith.constant 0 : i32
    %c0_i32_0 = arith.constant 0 : i32
    return %arg0, %c0_i32 : i32, i32
  }
  func.func @transform_5(%arg0: i32) -> (i32, i32) {
    %c0_i32 = arith.constant 0 : i32
    %c0_i32_0 = arith.constant 0 : i32
    return %arg0, %c0_i32 : i32, i32
  }
}

</mosaic_0001>

<llo_original>
// kernel: tpu_custom_call.1
$region0: #{tpu_custom_call.1}
  #allocation0 [shape = 'u32[]', space=smem, size = 0x4, offset = 0x4, fixed_abs, tag = 'smem constant byte address 0x4 - core index']
  #allocation1 [shape = 'u32[144,128]{1,0:T(1,128)}', space=vmem, size = 0x12000, scoped, tag = 'internal scratch']
  %s0 = inlined_call_operand.hbm [shape: f32[8,32], index: 0, kind: input, shape index: {}]
  %s1 = inlined_call_operand.hbm [shape: f32[8,32], index: 1, kind: input, shape index: {}]
  %s2 = inlined_call_operand.hbm [shape: f32[32,32], index: 2, kind: input, shape index: {}]
  %s3 = inlined_call_operand.hbm [shape: f32[32,32], index: 3, kind: input, shape index: {}]
  %s4 = inlined_call_operand.hbm [shape: f32[8,32], index: 4, kind: output, shape index: {0}]
  %s5 = inlined_call_operand.hbm [shape: f32[8,32], index: 5, kind: output, shape index: {1}]
  %6 = xla_tuple %s4, %s5
  %s7 = sld [smem:[#allocation0]]
  $region50: #{tpu_custom_call.1} parent=0
    _
  %s9 = ssub.s32 1, %s7
  %s10 = scalar_select 0, %s9, %s7
  $region1: #{tpu_custom_call.1} parent=0
    #allocation2 [shape = 'u8[4096]{0}', space=vmem, size = 0x1000, scoped, tag = 'input window, operand 0, single buffered']
    #allocation3 [shape = 's32[1]{0}', space=sflag, size = 0x4, scoped, tag = 'scoped memory for tpu_custom_call.1']
    #allocation4 [shape = 's32[1]{0}', space=sflag, size = 0x4, scoped, tag = 'scoped memory for tpu_custom_call.1']
    #allocation5 [shape = 'u8[4096]{0}', space=vmem, size = 0x1000, scoped, tag = 'input window, operand 1, single buffered']
    #allocation6 [shape = 's32[1]{0}', space=sflag, size = 0x4, scoped, tag = 'scoped memory for tpu_custom_call.1']
    #allocation7 [shape = 'u8[16384]{0}', space=vmem, size = 0x4000, scoped, tag = 'input window, operand 2, single buffered']
    #allocation8 [shape = 'u8[16384]{0}', space=vmem, size = 0x4000, scoped, tag = 'input window, operand 3, single buffered']
    #allocation9 [shape = 's32[1]{0}', space=sflag, size = 0x4, scoped, tag = 'scoped memory for tpu_custom_call.1']
    #allocation10 [shape = 'u8[4096]{0}', space=vmem, size = 0x1000, scoped, tag = 'output window, operand 0, single buffered']
    #allocation11 [shape = 'u8[4096]{0}', space=vmem, size = 0x1000, scoped, tag = 'output window, operand 1, single buffered']
    #allocation12 [shape = 's32[1]{0}', space=sflag, size = 0x4, scoped, tag = 'scoped memory for tpu_custom_call.1']
    %11 = vsyncpa [#allocation3], 0
    %12 = vsyncpa [#allocation6], 0
    %13 = vsyncpa [#allocation9], 0
    %14 = vsyncpa [#allocation4], 0
    %15 = vsyncpa [#allocation12], 0
    // Predicated region
    $region2: #{tpu_custom_call.1} parent=1 // pred_check
      _
    $region3: #{tpu_custom_call.1} parent=1 // pred_check_branch
      %17 = sbr.rel (0) target = $region5
    $region4: #{tpu_custom_call.1} parent=1 // pred_region
      %s19 = ssub.s32 128, 128
      %20 = vsyncadd [#allocation3], %s19
      %s22 = sshll.u32 [#allocation2], 4
      %s23 = int_to_ptr.vmem [resolvable:$true] %s22
      %25 = dma.hbm_to_vmem [thread:$0]  %s0, 128, %s23, [#allocation3]
    $region5: #{tpu_custom_call.1} parent=1 // pred_fallthru
      _
    // Predicated region
    $region6: #{tpu_custom_call.1} parent=1 // pred_check
      _
    $region7: #{tpu_custom_call.1} parent=1 // pred_check_branch
      %27 = sbr.rel (0) target = $region9
    $region8: #{tpu_custom_call.1} parent=1 // pred_region
      %s29 = ssub.s32 128, 128
      %30 = vsyncadd [#allocation6], %s29
      %s32 = sshll.u32 [#allocation5], 4
      %s33 = int_to_ptr.vmem [resolvable:$true] %s32
      %35 = dma.hbm_to_vmem [thread:$0]  %s1, 128, %s33, [#allocation6]
    $region9: #{tpu_custom_call.1} parent=1 // pred_fallthru
      _
    // Predicated region
    $region10: #{tpu_custom_call.1} parent=1 // pred_check
      _
    $region11: #{tpu_custom_call.1} parent=1 // pred_check_branch
      %37 = sbr.rel (0) target = $region13
    $region12: #{tpu_custom_call.1} parent=1 // pred_region
      %s39 = ssub.s32 512, 512
      %40 = vsyncadd [#allocation6], %s39
      %s41 = sshll.u32 [#allocation7], 4
      %s42 = int_to_ptr.vmem [resolvable:$true] %s41
      %47 = dma.hbm_to_vmem [thread:$0]  %s2, 512, %s42, [#allocation6], 128, 128, 8
    $region13: #{tpu_custom_call.1} parent=1 // pred_fallthru
      _
    // Predicated region
    $region14: #{tpu_custom_call.1} parent=1 // pred_check
      _
    $region15: #{tpu_custom_call.1} parent=1 // pred_check_branch
      %49 = sbr.rel (0) target = $region17
    $region16: #{tpu_custom_call.1} parent=1 // pred_region
      %s51 = ssub.s32 512, 512
      %52 = vsyncadd [#allocation9], %s51
      %s53 = sshll.u32 [#allocation8], 4
      %s54 = int_to_ptr.vmem [resolvable:$true] %s53
      %59 = dma.hbm_to_vmem [thread:$0]  %s3, 512, %s54, [#allocation9], 128, 128, 8
    $region17: #{tpu_custom_call.1} parent=1 // pred_fallthru
      _
    // Predicated region
    $region18: #{tpu_custom_call.1} parent=1 // pred_check
      _
    $region19: #{tpu_custom_call.1} parent=1 // pred_check_branch
      %61 = sbr.rel (0) target = $region21
    $region20: #{tpu_custom_call.1} parent=1 // pred_region
      %62 = dma.done [#allocation3], 128
    $region21: #{tpu_custom_call.1} parent=1 // pred_fallthru
      _
    // Predicated region
    $region22: #{tpu_custom_call.1} parent=1 // pred_check
      _
    $region23: #{tpu_custom_call.1} parent=1 // pred_check_branch
      %64 = sbr.rel (0) target = $region25
    $region24: #{tpu_custom_call.1} parent=1 // pred_region
      %65 = dma.done [#allocation6], 128
    $region25: #{tpu_custom_call.1} parent=1 // pred_fallthru
      _
    // Predicated region
    $region26: #{tpu_custom_call.1} parent=1 // pred_check
      _
    $region27: #{tpu_custom_call.1} parent=1 // pred_check_branch
      %67 = sbr.rel (0) target = $region29
    $region28: #{tpu_custom_call.1} parent=1 // pred_region
      %68 = dma.done [#allocation6], 512
    $region29: #{tpu_custom_call.1} parent=1 // pred_fallthru
      _
    // Predicated region
    $region30: #{tpu_custom_call.1} parent=1 // pred_check
      _
    $region31: #{tpu_custom_call.1} parent=1 // pred_check_branch
      %70 = sbr.rel (0) target = $region33
    $region32: #{tpu_custom_call.1} parent=1 // pred_region
      %71 = dma.done [#allocation9], 512
    $region33: #{tpu_custom_call.1} parent=1 // pred_fallthru
      _
    %v72 = vld [vmem:[#allocation2] sm:$0xff]
    %v73 = vld [vmem:[#allocation7] sm:$0xff]
    %v74 = vld [vmem:[#allocation7 + $0x8] sm:$0xff]
    %v75 = vld [vmem:[#allocation7 + $0x10] sm:$0xff]
    %v76 = vld [vmem:[#allocation7 + $0x18] sm:$0xff]
    %vm77 = vcmask 261120
    %v79 = vsel %vm77, %v72, 0
    %81 = vmatprep.subr.mxu0 0.0
    %82 = vmatpush1.msra.mxu0 %v73
    %83 = vmatprep.subr.mxu0 0.0
    %84 = vmatpush1.msra.mxu0 %v74
    %85 = vmatprep.subr.mxu0 0.0
    %86 = vmatpush1.msra.mxu0 %v75
    %87 = vmatprep.subr.mxu0 0.0
    %88 = vmatpush1.msra.mxu0 %v76
    %89 = vmatprep.subr.mxu0 0.0
    %90 = vmatpush1.msra.mxu0 0.0
    %91 = vmatprep.subr.mxu0 0.0
    %92 = vmatpush1.msra.mxu0 0.0
    %93 = vmatprep.subr.mxu0 0.0
    %94 = vmatpush1.msra.mxu0 0.0
    %95 = vmatprep.subr.mxu0 0.0
    %96 = vmatpush1.msra.mxu0 0.0
    %97 = vmatprep.subr.mxu0 0.0
    %98 = vmatpush1.msra.mxu0 0.0
    %99 = vmatprep.subr.mxu0 0.0
    %100 = vmatpush1.msra.mxu0 0.0
    %101 = vmatprep.subr.mxu0 0.0
    %102 = vmatpush1.msra.mxu0 0.0
    %103 = vmatprep.subr.mxu0 0.0
    %104 = vmatpush1.msra.mxu0 0.0
    %105 = vmatprep.subr.mxu0 0.0
    %106 = vmatpush1.msra.mxu0 0.0
    %107 = vmatprep.subr.mxu0 0.0
    %108 = vmatpush1.msra.mxu0 0.0
    %109 = vmatprep.subr.mxu0 0.0
    %110 = vmatpush1.msra.mxu0 0.0
    %111 = vmatprep.subr.mxu0 0.0
    %112 = vmatpush1.msra.mxu0 0.0
    %113 = vmatprep.subr.mxu0 0.0
    %114 = vmatpush1.msra.mxu0 0.0
    %115 = vmatprep.subr.mxu0 0.0
    %116 = vmatpush1.msra.mxu0 0.0
    %117 = vmatprep.subr.mxu0 0.0
    %118 = vmatpush1.msra.mxu0 0.0
    %119 = vmatprep.subr.mxu0 0.0
    %120 = vmatpush1.msra.mxu0 0.0
    %121 = vmatprep.subr.mxu0 0.0
    %122 = vmatpush1.msra.mxu0 0.0
    %123 = vmatprep.subr.mxu0 0.0
    %124 = vmatpush1.msra.mxu0 0.0
    %125 = vmatprep.subr.mxu0 0.0
    %126 = vmatpush1.msra.mxu0 0.0
    %127 = vmatprep.subr.mxu0 0.0
    %128 = vmatpush1.msra.mxu0 0.0
    %129 = vmatprep.subr.mxu0 0.0
    %130 = vmatpush1.msra.mxu0 0.0
    %131 = vmatprep.subr.mxu0 0.0
    %132 = vmatpush1.msra.mxu0 0.0
    %133 = vmatprep.subr.mxu0 0.0
    %134 = vmatpush1.msra.mxu0 0.0
    %135 = vmatprep.subr.mxu0 0.0
    %136 = vmatpush1.msra.mxu0 0.0
    %137 = vmatprep.subr.mxu0 0.0
    %138 = vmatpush1.msra.mxu0 0.0
    %139 = vmatprep.subr.mxu0 0.0
    %140 = vmatpush1.msra.mxu0 0.0
    %141 = vmatprep.subr.mxu0 0.0
    %142 = vmatpush1.msra.mxu0 0.0
    %143 = vmatprep.subr.mxu0 0.0
    %144 = vmatpush1.msra.mxu0 0.0
    %145 = vmatprep.mubr.f32.mxu0 0.0
    %146 = vmatmul.mubr.f32.gmra.mrb[0].mxu0 %v79
    %v147 = vpop.f32.mrb[0].mxu0
    %v148 = vadd.f32 0.0, %v147
    %v149 = vpop.f32.mrb[0].mxu0
    %150 = vdwg.mxu0
    %151 = vst.msk [vmem:[#allocation10] sm:$0xff] %vm77, %v148
    %v152 = vld [vmem:[#allocation5] sm:$0xff]
    %v153 = vld [vmem:[#allocation8] sm:$0xff]
    %v154 = vld [vmem:[#allocation8 + $0x8] sm:$0xff]
    %v155 = vld [vmem:[#allocation8 + $0x10] sm:$0xff]
    %v156 = vld [vmem:[#allocation8 + $0x18] sm:$0xff]
    %v158 = vsel %vm77, %v152, 0
    %160 = vmatprep.subr.mxu0 0.0
    %161 = vmatpush1.msra.mxu0 %v153
    %162 = vmatprep.subr.mxu0 0.0
    %163 = vmatpush1.msra.mxu0 %v154
    %164 = vmatprep.subr.mxu0 0.0
    %165 = vmatpush1.msra.mxu0 %v155
    %166 = vmatprep.subr.mxu0 0.0
    %167 = vmatpush1.msra.mxu0 %v156
    %168 = vmatprep.subr.mxu0 0.0
    %169 = vmatpush1.msra.mxu0 0.0
    %170 = vmatprep.subr.mxu0 0.0
    %171 = vmatpush1.msra.mxu0 0.0
    %172 = vmatprep.subr.mxu0 0.0
    %173 = vmatpush1.msra.mxu0 0.0
    %174 = vmatprep.subr.mxu0 0.0
    %175 = vmatpush1.msra.mxu0 0.0
    %176 = vmatprep.subr.mxu0 0.0
    %177 = vmatpush1.msra.mxu0 0.0
    %178 = vmatprep.subr.mxu0 0.0
    %179 = vmatpush1.msra.mxu0 0.0
    %180 = vmatprep.subr.mxu0 0.0
    %181 = vmatpush1.msra.mxu0 0.0
    %182 = vmatprep.subr.mxu0 0.0
    %183 = vmatpush1.msra.mxu0 0.0
    %184 = vmatprep.subr.mxu0 0.0
    %185 = vmatpush1.msra.mxu0 0.0
    %186 = vmatprep.subr.mxu0 0.0
    %187 = vmatpush1.msra.mxu0 0.0
    %188 = vmatprep.subr.mxu0 0.0
    %189 = vmatpush1.msra.mxu0 0.0
    %190 = vmatprep.subr.mxu0 0.0
    %191 = vmatpush1.msra.mxu0 0.0
    %192 = vmatprep.subr.mxu0 0.0
    %193 = vmatpush1.msra.mxu0 0.0
    %194 = vmatprep.subr.mxu0 0.0
    %195 = vmatpush1.msra.mxu0 0.0
    %196 = vmatprep.subr.mxu0 0.0
    %197 = vmatpush1.msra.mxu0 0.0
    %198 = vmatprep.subr.mxu0 0.0
    %199 = vmatpush1.msra.mxu0 0.0
    %200 = vmatprep.subr.mxu0 0.0
    %201 = vmatpush1.msra.mxu0 0.0
    %202 = vmatprep.subr.mxu0 0.0
    %203 = vmatpush1.msra.mxu0 0.0
    %204 = vmatprep.subr.mxu0 0.0
    %205 = vmatpush1.msra.mxu0 0.0
    %206 = vmatprep.subr.mxu0 0.0
    %207 = vmatpush1.msra.mxu0 0.0
    %208 = vmatprep.subr.mxu0 0.0
    %209 = vmatpush1.msra.mxu0 0.0
    %210 = vmatprep.subr.mxu0 0.0
    %211 = vmatpush1.msra.mxu0 0.0
    %212 = vmatprep.subr.mxu0 0.0
    %213 = vmatpush1.msra.mxu0 0.0
    %214 = vmatprep.subr.mxu0 0.0
    %215 = vmatpush1.msra.mxu0 0.0
    %216 = vmatprep.subr.mxu0 0.0
    %217 = vmatpush1.msra.mxu0 0.0
    %218 = vmatprep.subr.mxu0 0.0
    %219 = vmatpush1.msra.mxu0 0.0
    %220 = vmatprep.subr.mxu0 0.0
    %221 = vmatpush1.msra.mxu0 0.0
    %222 = vmatprep.subr.mxu0 0.0
    %223 = vmatpush1.msra.mxu0 0.0
    %224 = vmatprep.mubr.f32.mxu0 0.0
    %225 = vmatmul.mubr.f32.gmra.mrb[0].mxu0 %v158
    %v226 = vpop.f32.mrb[0].mxu0
    %v227 = vadd.f32 0.0, %v226
    %v228 = vpop.f32.mrb[0].mxu0
    %229 = vdwg.mxu0
    %230 = vst.msk [vmem:[#allocation11] sm:$0xff] %vm77, %v227
    // Predicated region
    $region34: #{tpu_custom_call.1} parent=1 // pred_check
      _
    $region35: #{tpu_custom_call.1} parent=1 // pred_check_branch
      %232 = sbr.rel (0) target = $region37
    $region36: #{tpu_custom_call.1} parent=1 // pred_region
      %s234 = ssub.s32 128, 128
      %235 = vsyncadd [#allocation4], %s234
      %s237 = sshll.u32 [#allocation10], 4
      %s238 = int_to_ptr.vmem [resolvable:$true] %s237
      %240 = dma.vmem_to_hbm [thread:$0]  %s238, 128, %s4, [#allocation4]
    $region37: #{tpu_custom_call.1} parent=1 // pred_fallthru
      _
    // Predicated region
    $region38: #{tpu_custom_call.1} parent=1 // pred_check
      _
    $region39: #{tpu_custom_call.1} parent=1 // pred_check_branch
      %242 = sbr.rel (0) target = $region41
    $region40: #{tpu_custom_call.1} parent=1 // pred_region
      %s244 = ssub.s32 128, 128
      %245 = vsyncadd [#allocation12], %s244
      %s247 = sshll.u32 [#allocation11], 4
      %s248 = int_to_ptr.vmem [resolvable:$true] %s247
      %250 = dma.vmem_to_hbm [thread:$0]  %s248, 128, %s5, [#allocation12]
    $region41: #{tpu_custom_call.1} parent=1 // pred_fallthru
      _
    // Predicated region
    $region42: #{tpu_custom_call.1} parent=1 // pred_check
      _
    $region43: #{tpu_custom_call.1} parent=1 // pred_check_branch
      %252 = sbr.rel (0) target = $region45
    $region44: #{tpu_custom_call.1} parent=1 // pred_region
      %253 = dma.done [#allocation4], 128
    $region45: #{tpu_custom_call.1} parent=1 // pred_fallthru
      _
    // Predicated region
    $region46: #{tpu_custom_call.1} parent=1 // pred_check
      _
    $region47: #{tpu_custom_call.1} parent=1 // pred_check_branch
      %255 = sbr.rel (0) target = $region49
    $region48: #{tpu_custom_call.1} parent=1 // pred_region
      %256 = dma.done [#allocation12], 128
    $region49: #{tpu_custom_call.1} parent=1 // pred_fallthru
      _
    %257 = vsyncpa [#allocation3], 1
    %258 = vsyncpa [#allocation6], 1
    %259 = vsyncpa [#allocation9], 1
    %260 = vsyncpa [#allocation4], 1
    %261 = vsyncpa [#allocation12], 1

</llo_original>
